<compile_context>
chip_gen: v5e
topology: v5e:2x2
jax: 0.10.0
libtpu: 0.0.40
codegen_flags: <defaults>
</compile_context>

<pallas_src>
import jax
import jax.numpy as jnp
from jax.experimental import pallas as pl
from jax.experimental.pallas import tpu as pltpu

LANE = 128  # TPU lane width; pad all feature dims of layer outputs to this.


def mlp_kernel(x_ref, w1_ref, b1_ref, w2_ref, b2_ref, w3_ref, b3_ref, o_ref):
    # One (TILE_B, 784) batch tile per grid step; all weights resident in VMEM.
    x = x_ref[...]
    h1 = jnp.dot(x, w1_ref[...], preferred_element_type=jnp.float32) + b1_ref[...]
    h1 = jnp.maximum(h1, 0.0)
    h2 = jnp.dot(h1, w2_ref[...], preferred_element_type=jnp.float32) + b2_ref[...]
    h2 = jnp.maximum(h2, 0.0)
    out = jnp.dot(h2, w3_ref[...], preferred_element_type=jnp.float32) + b3_ref[...]
    o_ref[...] = out.astype(o_ref.dtype)


def _pad_lane(w, b):
    """Zero-pad weight (in, out) and bias (1, out) up to LANE output columns."""
    out = w.shape[1]
    pad = (-out) % LANE
    if pad:
        w = jnp.pad(w, ((0, 0), (0, pad)))
        b = jnp.pad(b, ((0, 0), (0, pad)))
    return w, b


def custom_mlp_forward(img, params, tile_b=1024):
    """img: (B, 1, 28, 28) float32 -> logits (B, 10) float32."""
    w1, b1, w2, b2, w3, b3 = params
    B = img.shape[0]
    x = img.reshape(B, -1)  # torch.flatten(img, 1)
    D_in = w1.shape[0]
    D_out = w3.shape[1]  # true number of classes (10)

    # Lane-dense padding of layer output dims (and matching input dims of the
    # next layer).  Padded columns stay exactly zero through ReLU, so this is
    # numerically identical to the unpadded network.
    w1p, b1p = _pad_lane(w1, b1)                                   # (784, 128)
    w2p = jnp.pad(w2, ((0, w1p.shape[1] - w2.shape[0]), (0, 0)))   # (128, 20)
    w2p, b2p = _pad_lane(w2p, b2)                                  # (128, 128)
    w3p = jnp.pad(w3, ((0, w2p.shape[1] - w3.shape[0]), (0, 0)))   # (128, 10)
    w3p, b3p = _pad_lane(w3p, b3)                                  # (128, 128)
    D_out_p = w3p.shape[1]

    # Pick a batch tile: multiple of 8 (f32 sublane), capped at tile_b.
    tb = min(tile_b, ((B + 7) // 8) * 8)
    b_padded = pl.cdiv(B, tb) * tb
    if b_padded != B:
        x = jnp.pad(x, ((0, b_padded - B), (0, 0)))
    grid = (b_padded // tb,)

    # Batch-tiled x / out; weights & biases use constant index maps so they
    # are fetched once and stay resident across grid iterations.
    x_spec = pl.BlockSpec((tb, D_in), lambda i: (i, 0))
    out_spec = pl.BlockSpec((tb, D_out_p), lambda i: (i, 0))
    const2d = lambda shape: pl.BlockSpec(shape, lambda i: (0, 0))
    in_specs = [
        x_spec,
        const2d(w1p.shape), const2d(b1p.shape),
        const2d(w2p.shape), const2d(b2p.shape),
        const2d(w3p.shape), const2d(b3p.shape),
    ]

    flops = 2 * B * (784 * 80 + 80 * 20 + 20 * 10)
    weight_bytes = sum(int(p.size) * 4 for p in (w1p, b1p, w2p, b2p, w3p, b3p))
    bytes_accessed = b_padded * D_in * 4 + weight_bytes + b_padded * D_out_p * 4

    out = pl.pallas_call(
        mlp_kernel,
        out_shape=jax.ShapeDtypeStruct((b_padded, D_out_p), jnp.float32),
        grid=grid,
        in_specs=in_specs,
        out_specs=out_spec,
        compiler_params=pltpu.CompilerParams(
            dimension_semantics=("parallel",),
        ),
        cost_estimate=pl.CostEstimate(
            flops=flops, transcendentals=0, bytes_accessed=bytes_accessed
        ),
    )(x, w1p, b1p, w2p, b2p, w3p, b3p)

    return out[:B, :D_out]


def init_params(key):
    """Deterministic init matching PyTorch Linear layer shapes.

    fc1: 784 -> 80, fc2: 80 -> 20, fc3: 20 -> 10.
    Weights stored as (in, out); biases as (1, out).
    """
    dims = [(784, 80), (80, 20), (20, 10)]
    params = []
    for (fan_in, fan_out) in dims:
        key, kw, kb = jax.random.split(key, 3)
        bound = 1.0 / (fan_in ** 0.5)  # same bound as PyTorch default init
        w = jax.random.uniform(kw, (fan_in, fan_out), jnp.float32, -bound, bound)
        b = jax.random.uniform(kb, (1, fan_out), jnp.float32, -bound, bound)
        params.extend([w, b])
    return tuple(params)


def reference_forward(img, params):
    w1, b1, w2, b2, w3, b3 = params
    x = img.reshape(img.shape[0], -1)
    h1 = jnp.maximum(x @ w1 + b1, 0.0)
    h2 = jnp.maximum(h1 @ w2 + b2, 0.0)
    return h2 @ w3 + b3


if __name__ == "__main__":
    key = jax.random.PRNGKey(0)
    key, kimg = jax.random.split(key)
    params = init_params(key)

    # Small batch (ragged: exercises the pad + slice path).
    img = jax.random.normal(kimg, (2, 1, 28, 28), jnp.float32)
    out = custom_mlp_forward(img, params)
    out = jax.block_until_ready(out)
    ref = reference_forward(img, params)
    assert out.shape == (2, 10)
    assert jnp.allclose(out, ref, atol=1e-4, rtol=1e-4)

    # Slightly larger ragged batch to exercise multi-step grid + tail padding.
    key, kimg2 = jax.random.split(key)
    img2 = jax.random.normal(kimg2, (50, 1, 28, 28), jnp.float32)
    out2 = jax.block_until_ready(custom_mlp_forward(img2, params, tile_b=16))
    ref2 = reference_forward(img2, params)
    assert out2.shape == (50, 10)
    assert jnp.allclose(out2, ref2, atol=1e-4, rtol=1e-4)

    print("KERNEL_OK")
</pallas_src>

<mosaic_0001>
module attributes {stable_mosaic.version = 11 : i64} {
  func.func @mlp_kernel(%arg0: i32, %arg1: memref<8x784xf32, #tpu.memory_space<vmem>>, %arg2: memref<784x128xf32, #tpu.memory_space<vmem>>, %arg3: memref<1x128xf32, #tpu.memory_space<vmem>>, %arg4: memref<128x128xf32, #tpu.memory_space<vmem>>, %arg5: memref<1x128xf32, #tpu.memory_space<vmem>>, %arg6: memref<128x128xf32, #tpu.memory_space<vmem>>, %arg7: memref<1x128xf32, #tpu.memory_space<vmem>>, %arg8: memref<8x128xf32, #tpu.memory_space<vmem>>) attributes {dimension_semantics = [#tpu.dimension_semantics<parallel>], iteration_bounds = array<i64: 1>, scalar_prefetch = 0 : i64, scratch_operands = 0 : i64, tpu.core_type = #tpu.core_type<tc>, window_params = [{transform_indices = @transform_0, window_bounds = array<i64: 8, 784>}, {pipeline_mode = #tpu.pipeline_mode<synchronous>, transform_indices = @transform_1, window_bounds = array<i64: 784, 128>}, {pipeline_mode = #tpu.pipeline_mode<synchronous>, transform_indices = @transform_2, window_bounds = array<i64: 1, 128>}, {pipeline_mode = #tpu.pipeline_mode<synchronous>, transform_indices = @transform_3, window_bounds = array<i64: 128, 128>}, {pipeline_mode = #tpu.pipeline_mode<synchronous>, transform_indices = @transform_4, window_bounds = array<i64: 1, 128>}, {pipeline_mode = #tpu.pipeline_mode<synchronous>, transform_indices = @transform_5, window_bounds = array<i64: 128, 128>}, {pipeline_mode = #tpu.pipeline_mode<synchronous>, transform_indices = @transform_6, window_bounds = array<i64: 1, 128>}, {transform_indices = @transform_7, window_bounds = array<i64: 8, 128>}]} {
    %c0 = arith.constant 0 : index
    %c0_0 = arith.constant 0 : index
    %0 = vector.load %arg1[%c0, %c0_0] : memref<8x784xf32, #tpu.memory_space<vmem>>, vector<8x784xf32>
    %c0_1 = arith.constant 0 : index
    %c0_2 = arith.constant 0 : index
    %1 = vector.load %arg2[%c0_1, %c0_2] : memref<784x128xf32, #tpu.memory_space<vmem>>, vector<784x128xf32>
    %cst = arith.constant dense<0.000000e+00> : vector<8x128xf32>
    %2 = tpu.matmul %0, %1, %cst {dimension_numbers = #tpu.dot_dimension_numbers<[1], [0], [0], [1], [0, 0, 1, 1], [], []>} : vector<8x784xf32>, vector<784x128xf32>, vector<8x128xf32> -> vector<8x128xf32>
    %c0_3 = arith.constant 0 : index
    %c0_4 = arith.constant 0 : index
    %3 = vector.load %arg3[%c0_3, %c0_4] : memref<1x128xf32, #tpu.memory_space<vmem>>, vector<1x128xf32>
    %4 = vector.broadcast %3 : vector<1x128xf32> to vector<8x128xf32>
    %5 = arith.addf %2, %4 : vector<8x128xf32>
    %cst_5 = arith.constant 0.000000e+00 : f32
    %6 = vector.broadcast %cst_5 : f32 to vector<8x128xf32>
    %7 = arith.maximumf %5, %6 : vector<8x128xf32>
    %c0_6 = arith.constant 0 : index
    %c0_7 = arith.constant 0 : index
    %8 = vector.load %arg4[%c0_6, %c0_7] : memref<128x128xf32, #tpu.memory_space<vmem>>, vector<128x128xf32>
    %cst_8 = arith.constant dense<0.000000e+00> : vector<8x128xf32>
    %9 = tpu.matmul %7, %8, %cst_8 {dimension_numbers = #tpu.dot_dimension_numbers<[1], [0], [0], [1], [0, 0, 1, 1], [], []>} : vector<8x128xf32>, vector<128x128xf32>, vector<8x128xf32> -> vector<8x128xf32>
    %c0_9 = arith.constant 0 : index
    %c0_10 = arith.constant 0 : index
    %10 = vector.load %arg5[%c0_9, %c0_10] : memref<1x128xf32, #tpu.memory_space<vmem>>, vector<1x128xf32>
    %11 = vector.broadcast %10 : vector<1x128xf32> to vector<8x128xf32>
    %12 = arith.addf %9, %11 : vector<8x128xf32>
    %cst_11 = arith.constant 0.000000e+00 : f32
    %13 = vector.broadcast %cst_11 : f32 to vector<8x128xf32>
    %14 = arith.maximumf %12, %13 : vector<8x128xf32>
    %c0_12 = arith.constant 0 : index
    %c0_13 = arith.constant 0 : index
    %15 = vector.load %arg6[%c0_12, %c0_13] : memref<128x128xf32, #tpu.memory_space<vmem>>, vector<128x128xf32>
    %cst_14 = arith.constant dense<0.000000e+00> : vector<8x128xf32>
    %16 = tpu.matmul %14, %15, %cst_14 {dimension_numbers = #tpu.dot_dimension_numbers<[1], [0], [0], [1], [0, 0, 1, 1], [], []>} : vector<8x128xf32>, vector<128x128xf32>, vector<8x128xf32> -> vector<8x128xf32>
    %c0_15 = arith.constant 0 : index
    %c0_16 = arith.constant 0 : index
    %17 = vector.load %arg7[%c0_15, %c0_16] : memref<1x128xf32, #tpu.memory_space<vmem>>, vector<1x128xf32>
    %18 = vector.broadcast %17 : vector<1x128xf32> to vector<8x128xf32>
    %19 = arith.addf %16, %18 : vector<8x128xf32>
    %c0_17 = arith.constant 0 : index
    %c0_18 = arith.constant 0 : index
    %20 = vector.load %arg8[%c0_17, %c0_18] : memref<8x128xf32, #tpu.memory_space<vmem>>, vector<8x128xf32>
    tpu.vector_store %arg8[%c0_17, %c0_18], %19 {strides = array<i32>} : memref<8x128xf32, #tpu.memory_space<vmem>>, vector<8x128xf32>,
    return
  }
  func.func @transform_0(%arg0: i32) -> (i32, i32) {
    %c0_i32 = arith.constant 0 : i32
    %c0_i32_0 = arith.constant 0 : i32
    return %arg0, %c0_i32 : i32, i32
  }
  func.func @transform_1(%arg0: i32) -> (i32, i32) {
    %c0_i32 = arith.constant 0 : i32
    %c0_i32_0 = arith.constant 0 : i32
    %c0_i32_1 = arith.constant 0 : i32
    return %c0_i32, %c0_i32_0 : i32, i32
  }
  func.func @transform_2(%arg0: i32) -> (i32, i32) {
    %c0_i32 = arith.constant 0 : i32
    %c0_i32_0 = arith.constant 0 : i32
    %c0_i32_1 = arith.constant 0 : i32
    return %c0_i32, %c0_i32_0 : i32, i32
  }
  func.func @transform_3(%arg0: i32) -> (i32, i32) {
    %c0_i32 = arith.constant 0 : i32
    %c0_i32_0 = arith.constant 0 : i32
    %c0_i32_1 = arith.constant 0 : i32
    return %c0_i32, %c0_i32_0 : i32, i32
  }
  func.func @transform_4(%arg0: i32) -> (i32, i32) {
    %c0_i32 = arith.constant 0 : i32
    %c0_i32_0 = arith.constant 0 : i32
    %c0_i32_1 = arith.constant 0 : i32
    return %c0_i32, %c0_i32_0 : i32, i32
  }
  func.func @transform_5(%arg0: i32) -> (i32, i32) {
    %c0_i32 = arith.constant 0 : i32
    %c0_i32_0 = arith.constant 0 : i32
    %c0_i32_1 = arith.constant 0 : i32
    return %c0_i32, %c0_i32_0 : i32, i32
  }
  func.func @transform_6(%arg0: i32) -> (i32, i32) {
    %c0_i32 = arith.constant 0 : i32
    %c0_i32_0 = arith.constant 0 : i32
    %c0_i32_1 = arith.constant 0 : i32
    return %c0_i32, %c0_i32_0 : i32, i32
  }
  func.func @transform_7(%arg0: i32) -> (i32, i32) {
    %c0_i32 = arith.constant 0 : i32
    %c0_i32_0 = arith.constant 0 : i32
    return %arg0, %c0_i32 : i32, i32
  }
}

</mosaic_0001>

<llo_original>
// kernel: tpu_custom_call.1
$region0: #{tpu_custom_call.1}
  #allocation0 [shape = 'u32[]', space=smem, size = 0x4, offset = 0x4, fixed_abs, tag = 'smem constant byte address 0x4 - core index']
  #allocation1 [shape = 'u32[72,128]{1,0:T(1,128)}', space=vmem, size = 0x9000, scoped, tag = 'internal scratch']
  %s0 = inlined_call_operand.hbm [shape: f32[8,784], index: 0, kind: input, shape index: {}]
  %s1 = inlined_call_operand.hbm [shape: f32[784,128], index: 1, kind: input, shape index: {}]
  %s2 = inlined_call_operand.vmem [shape: f32[1,128], index: 2, kind: input, shape index: {}]
  %s3 = inlined_call_operand.hbm [shape: f32[128,128], index: 3, kind: input, shape index: {}]
  %s4 = inlined_call_operand.vmem [shape: f32[1,128], index: 4, kind: input, shape index: {}]
  %s5 = inlined_call_operand.hbm [shape: f32[128,128], index: 5, kind: input, shape index: {}]
  %s6 = inlined_call_operand.vmem [shape: f32[1,128], index: 6, kind: input, shape index: {}]
  %s7 = inlined_call_operand.hbm [shape: f32[8,128], index: 7, kind: output, shape index: {}]
  %s8 = sld [smem:[#allocation0]]
  $region54: #{tpu_custom_call.1} parent=0
    _
  %s10 = ssub.s32 1, %s8
  %s11 = scalar_select 0, %s10, %s8
  $region1: #{tpu_custom_call.1} parent=0
    #allocation2 [shape = 'u8[28672]{0}', space=vmem, size = 0x7000, scoped, tag = 'input window, operand 0, single buffered']
    #allocation3 [shape = 's32[1]{0}', space=sflag, size = 0x4, scoped, tag = 'scoped memory for tpu_custom_call.1']
    #allocation4 [shape = 's32[1]{0}', space=sflag, size = 0x4, scoped, tag = 'scoped memory for tpu_custom_call.1']
    #allocation5 [shape = 'u8[401408]{0}', space=vmem, size = 0x62000, scoped, tag = 'input window, operand 1, single buffered']
    #allocation6 [shape = 's32[1]{0}', space=sflag, size = 0x4, scoped, tag = 'scoped memory for tpu_custom_call.1']
    #allocation7 [shape = 'u8[65536]{0}', space=vmem, size = 0x10000, scoped, tag = 'input window, operand 3, single buffered']
    #allocation8 [shape = 'u8[65536]{0}', space=vmem, size = 0x10000, scoped, tag = 'input window, operand 5, single buffered']
    #allocation9 [shape = 's32[1]{0}', space=sflag, size = 0x4, scoped, tag = 'scoped memory for tpu_custom_call.1']
    #allocation10 [shape = 'u8[4096]{0}', space=vmem, size = 0x1000, scoped, tag = 'output window, operand 0, single buffered']
    %12 = vsyncpa [#allocation3], 0
    %13 = vsyncpa [#allocation6], 0
    %14 = vsyncpa [#allocation9], 0
    %15 = vsyncpa [#allocation4], 0
    // Predicated region
    $region2: #{tpu_custom_call.1} parent=1 // pred_check
      _
    $region3: #{tpu_custom_call.1} parent=1 // pred_check_branch
      %17 = sbr.rel (0) target = $region5
    $region4: #{tpu_custom_call.1} parent=1 // pred_region
      %19 = vsyncadd [#allocation3], 0
      %s21 = sshll.u32 %s0, 4
      %s22 = int_to_ptr.hbm [resolvable:$true] %s21
      %s23 = sshll.u32 [#allocation2], 4
      %s24 = int_to_ptr.vmem [resolvable:$true] %s23
      %26 = dma.hbm_to_vmem [thread:$0]  %s22, 896, %s24, [#allocation3]
    $region5: #{tpu_custom_call.1} parent=1 // pred_fallthru
      _
    // Predicated region
    $region6: #{tpu_custom_call.1} parent=1 // pred_check
      _
    $region7: #{tpu_custom_call.1} parent=1 // pred_check_branch
      %28 = sbr.rel (0) target = $region9
    $region8: #{tpu_custom_call.1} parent=1 // pred_region
      %30 = vsyncadd [#allocation6], 0
      %s31 = sshll.u32 %s1, 4
      %s32 = int_to_ptr.hbm [resolvable:$true] %s31
      %s33 = sshll.u32 [#allocation5], 4
      %s34 = int_to_ptr.vmem [resolvable:$true] %s33
      %39 = dma.hbm_to_vmem [thread:$0]  %s32, 12544, %s34, [#allocation6], 128, 128, 8
    $region9: #{tpu_custom_call.1} parent=1 // pred_fallthru
      _
    // Predicated region
    $region10: #{tpu_custom_call.1} parent=1 // pred_check
      _
    $region11: #{tpu_custom_call.1} parent=1 // pred_check_branch
      %41 = sbr.rel (0) target = $region13
    $region12: #{tpu_custom_call.1} parent=1 // pred_region
      _
    $region13: #{tpu_custom_call.1} parent=1 // pred_fallthru
      _
    // Predicated region
    $region14: #{tpu_custom_call.1} parent=1 // pred_check
      _
    $region15: #{tpu_custom_call.1} parent=1 // pred_check_branch
      %43 = sbr.rel (0) target = $region17
    $region16: #{tpu_custom_call.1} parent=1 // pred_region
      %45 = vsyncadd [#allocation6], 0
      %s46 = sshll.u32 %s3, 4
      %s47 = int_to_ptr.hbm [resolvable:$true] %s46
      %s48 = sshll.u32 [#allocation7], 4
      %s49 = int_to_ptr.vmem [resolvable:$true] %s48
      %54 = dma.hbm_to_vmem [thread:$0]  %s47, 2048, %s49, [#allocation6], 128, 128, 8
    $region17: #{tpu_custom_call.1} parent=1 // pred_fallthru
      _
    // Predicated region
    $region18: #{tpu_custom_call.1} parent=1 // pred_check
      _
    $region19: #{tpu_custom_call.1} parent=1 // pred_check_branch
      %56 = sbr.rel (0) target = $region21
    $region20: #{tpu_custom_call.1} parent=1 // pred_region
      _
    $region21: #{tpu_custom_call.1} parent=1 // pred_fallthru
      _
    // Predicated region
    $region22: #{tpu_custom_call.1} parent=1 // pred_check
      _
    $region23: #{tpu_custom_call.1} parent=1 // pred_check_branch
      %58 = sbr.rel (0) target = $region25
    $region24: #{tpu_custom_call.1} parent=1 // pred_region
      %60 = vsyncadd [#allocation9], 0
      %s61 = sshll.u32 %s5, 4
      %s62 = int_to_ptr.hbm [resolvable:$true] %s61
      %s63 = sshll.u32 [#allocation8], 4
      %s64 = int_to_ptr.vmem [resolvable:$true] %s63
      %69 = dma.hbm_to_vmem [thread:$0]  %s62, 2048, %s64, [#allocation9], 128, 128, 8
    $region25: #{tpu_custom_call.1} parent=1 // pred_fallthru
      _
    // Predicated region
    $region26: #{tpu_custom_call.1} parent=1 // pred_check
      _
    $region27: #{tpu_custom_call.1} parent=1 // pred_check_branch
      %71 = sbr.rel (0) target = $region29
    $region28: #{tpu_custom_call.1} parent=1 // pred_region
      _
    $region29: #{tpu_custom_call.1} parent=1 // pred_fallthru
      _
    // Predicated region
    $region30: #{tpu_custom_call.1} parent=1 // pred_check
      _
    $region31: #{tpu_custom_call.1} parent=1 // pred_check_branch
      %73 = sbr.rel (0) target = $region33
    $region32: #{tpu_custom_call.1} parent=1 // pred_region
      %75 = dma.done [#allocation3], 896
    $region33: #{tpu_custom_call.1} parent=1 // pred_fallthru
      _
    // Predicated region
    $region34: #{tpu_custom_call.1} parent=1 // pred_check
      _
    $region35: #{tpu_custom_call.1} parent=1 // pred_check_branch
      %77 = sbr.rel (0) target = $region37
    $region36: #{tpu_custom_call.1} parent=1 // pred_region
      %79 = dma.done [#allocation6], 12544
    $region37: #{tpu_custom_call.1} parent=1 // pred_fallthru
      _
    // Predicated region
    $region38: #{tpu_custom_call.1} parent=1 // pred_check
      _
    $region39: #{tpu_custom_call.1} parent=1 // pred_check_branch
      %81 = sbr.rel (0) target = $region41
    $region40: #{tpu_custom_call.1} parent=1 // pred_region
      %83 = dma.done [#allocation6], 2048
    $region41: #{tpu_custom_call.1} parent=1 // pred_fallthru
      _
    // Predicated region
    $region42: #{tpu_custom_call.1} parent=1 // pred_check
      _
    $region43: #{tpu_custom_call.1} parent=1 // pred_check_branch
      %85 = sbr.rel (0) target = $region45
    $region44: #{tpu_custom_call.1} parent=1 // pred_region
      %87 = dma.done [#allocation9], 2048
    $region45: #{tpu_custom_call.1} parent=1 // pred_fallthru
      _
    %v88 = vld [vmem:[#allocation2] sm:$0xff]
    %v89 = vld [vmem:[#allocation2 + $0x8] sm:$0xff]
    %v90 = vld [vmem:[#allocation2 + $0x10] sm:$0xff]
    %v91 = vld [vmem:[#allocation2 + $0x18] sm:$0xff]
    %v92 = vld [vmem:[#allocation2 + $0x20] sm:$0xff]
    %v93 = vld [vmem:[#allocation2 + $0x28] sm:$0xff]
    %v94 = vld [vmem:[#allocation2 + $0x30] sm:$0xff]
    %v95 = vld [vmem:[#allocation5] sm:$0xff]
    %v96 = vld [vmem:[#allocation5 + $0x8] sm:$0xff]
    %v97 = vld [vmem:[#allocation5 + $0x10] sm:$0xff]
    %v98 = vld [vmem:[#allocation5 + $0x18] sm:$0xff]
    %v99 = vld [vmem:[#allocation5 + $0x20] sm:$0xff]
    %v100 = vld [vmem:[#allocation5 + $0x28] sm:$0xff]
    %v101 = vld [vmem:[#allocation5 + $0x30] sm:$0xff]
    %v102 = vld [vmem:[#allocation5 + $0x38] sm:$0xff]
    %v103 = vld [vmem:[#allocation5 + $0x40] sm:$0xff]
    %v104 = vld [vmem:[#allocation5 + $0x48] sm:$0xff]
    %v105 = vld [vmem:[#allocation5 + $0x50] sm:$0xff]
    %v106 = vld [vmem:[#allocation5 + $0x58] sm:$0xff]
    %v107 = vld [vmem:[#allocation5 + $0x60] sm:$0xff]
    %v108 = vld [vmem:[#allocation5 + $0x68] sm:$0xff]
    %v109 = vld [vmem:[#allocation5 + $0x70] sm:$0xff]
    %v110 = vld [vmem:[#allocation5 + $0x78] sm:$0xff]
    %v111 = vld [vmem:[#allocation5 + $0x80] sm:$0xff]
    %v112 = vld [vmem:[#allocation5 + $0x88] sm:$0xff]
    %v113 = vld [vmem:[#allocation5 + $0x90] sm:$0xff]
    %v114 = vld [vmem:[#allocation5 + $0x98] sm:$0xff]
    %v115 = vld [vmem:[#allocation5 + $0xa0] sm:$0xff]
    %v116 = vld [vmem:[#allocation5 + $0xa8] sm:$0xff]
    %v117 = vld [vmem:[#allocation5 + $0xb0] sm:$0xff]
    %v118 = vld [vmem:[#allocation5 + $0xb8] sm:$0xff]
    %v119 = vld [vmem:[#allocation5 + $0xc0] sm:$0xff]
    %v120 = vld [vmem:[#allocation5 + $0xc8] sm:$0xff]
    %v121 = vld [vmem:[#allocation5 + $0xd0] sm:$0xff]
    %v122 = vld [vmem:[#allocation5 + $0xd8] sm:$0xff]
    %v123 = vld [vmem:[#allocation5 + $0xe0] sm:$0xff]
    %v124 = vld [vmem:[#allocation5 + $0xe8] sm:$0xff]
    %v125 = vld [vmem:[#allocation5 + $0xf0] sm:$0xff]
    %v126 = vld [vmem:[#allocation5 + $0xf8] sm:$0xff]
    %v127 = vld [vmem:[#allocation5 + $0x100] sm:$0xff]
    %v128 = vld [vmem:[#allocation5 + $0x108] sm:$0xff]
    %v129 = vld [vmem:[#allocation5 + $0x110] sm:$0xff]
    %v130 = vld [vmem:[#allocation5 + $0x118] sm:$0xff]
    %v131 = vld [vmem:[#allocation5 + $0x120] sm:$0xff]
    %v132 = vld [vmem:[#allocation5 + $0x128] sm:$0xff]
    %v133 = vld [vmem:[#allocation5 + $0x130] sm:$0xff]
    %v134 = vld [vmem:[#allocation5 + $0x138] sm:$0xff]
    %v135 = vld [vmem:[#allocation5 + $0x140] sm:$0xff]
    %v136 = vld [vmem:[#allocation5 + $0x148] sm:$0xff]
    %v137 = vld [vmem:[#allocation5 + $0x150] sm:$0xff]
    %v138 = vld [vmem:[#allocation5 + $0x158] sm:$0xff]
    %v139 = vld [vmem:[#allocation5 + $0x160] sm:$0xff]
    %v140 = vld [vmem:[#allocation5 + $0x168] sm:$0xff]
    %v141 = vld [vmem:[#allocation5 + $0x170] sm:$0xff]
    %v142 = vld [vmem:[#allocation5 + $0x178] sm:$0xff]
    %v143 = vld [vmem:[#allocation5 + $0x180] sm:$0xff]
    %v144 = vld [vmem:[#allocation5 + $0x188] sm:$0xff]
    %v145 = vld [vmem:[#allocation5 + $0x190] sm:$0xff]
    %v146 = vld [vmem:[#allocation5 + $0x198] sm:$0xff]
    %v147 = vld [vmem:[#allocation5 + $0x1a0] sm:$0xff]
    %v148 = vld [vmem:[#allocation5 + $0x1a8] sm:$0xff]
    %v149 = vld [vmem:[#allocation5 + $0x1b0] sm:$0xff]
    %v150 = vld [vmem:[#allocation5 + $0x1b8] sm:$0xff]
    %v151 = vld [vmem:[#allocation5 + $0x1c0] sm:$0xff]
    %v152 = vld [vmem:[#allocation5 + $0x1c8] sm:$0xff]
    %v153 = vld [vmem:[#allocation5 + $0x1d0] sm:$0xff]
    %v154 = vld [vmem:[#allocation5 + $0x1d8] sm:$0xff]
    %v155 = vld [vmem:[#allocation5 + $0x1e0] sm:$0xff]
    %v156 = vld [vmem:[#allocation5 + $0x1e8] sm:$0xff]
    %v157 = vld [vmem:[#allocation5 + $0x1f0] sm:$0xff]
    %v158 = vld [vmem:[#allocation5 + $0x1f8] sm:$0xff]
    %v159 = vld [vmem:[#allocation5 + $0x200] sm:$0xff]
    %v160 = vld [vmem:[#allocation5 + $0x208] sm:$0xff]
    %v161 = vld [vmem:[#allocation5 + $0x210] sm:$0xff]
    %v162 = vld [vmem:[#allocation5 + $0x218] sm:$0xff]
    %v163 = vld [vmem:[#allocation5 + $0x220] sm:$0xff]
    %v164 = vld [vmem:[#allocation5 + $0x228] sm:$0xff]
    %v165 = vld [vmem:[#allocation5 + $0x230] sm:$0xff]
    %v166 = vld [vmem:[#allocation5 + $0x238] sm:$0xff]
    %v167 = vld [vmem:[#allocation5 + $0x240] sm:$0xff]
    %v168 = vld [vmem:[#allocation5 + $0x248] sm:$0xff]
    %v169 = vld [vmem:[#allocation5 + $0x250] sm:$0xff]
    %v170 = vld [vmem:[#allocation5 + $0x258] sm:$0xff]
    %v171 = vld [vmem:[#allocation5 + $0x260] sm:$0xff]
    %v172 = vld [vmem:[#allocation5 + $0x268] sm:$0xff]
    %v173 = vld [vmem:[#allocation5 + $0x270] sm:$0xff]
    %v174 = vld [vmem:[#allocation5 + $0x278] sm:$0xff]
    %v175 = vld [vmem:[#allocation5 + $0x280] sm:$0xff]
    %v176 = vld [vmem:[#allocation5 + $0x288] sm:$0xff]
    %v177 = vld [vmem:[#allocation5 + $0x290] sm:$0xff]
    %v178 = vld [vmem:[#allocation5 + $0x298] sm:$0xff]
    %v179 = vld [vmem:[#allocation5 + $0x2a0] sm:$0xff]
    %v180 = vld [vmem:[#allocation5 + $0x2a8] sm:$0xff]
    %v181 = vld [vmem:[#allocation5 + $0x2b0] sm:$0xff]
    %v182 = vld [vmem:[#allocation5 + $0x2b8] sm:$0xff]
    %v183 = vld [vmem:[#allocation5 + $0x2c0] sm:$0xff]
    %v184 = vld [vmem:[#allocation5 + $0x2c8] sm:$0xff]
    %v185 = vld [vmem:[#allocation5 + $0x2d0] sm:$0xff]
    %v186 = vld [vmem:[#allocation5 + $0x2d8] sm:$0xff]
    %v187 = vld [vmem:[#allocation5 + $0x2e0] sm:$0xff]
    %v188 = vld [vmem:[#allocation5 + $0x2e8] sm:$0xff]
    %v189 = vld [vmem:[#allocation5 + $0x2f0] sm:$0xff]
    %v190 = vld [vmem:[#allocation5 + $0x2f8] sm:$0xff]
    %v191 = vld [vmem:[#allocation5 + $0x300] sm:$0xff]
    %v192 = vld [vmem:[#allocation5 + $0x308] sm:$0xff]
    %v193 = vld [vmem:[%s2] sm:$0x1]
    %v195 = vperm.slane %v193, 0
    %vm197 = vcmask 130048
    %v199 = vsel %vm197, %v94, 0
    %201 = vmatpush.msra.mxu0 %v110
    %202 = vmatpush.msra.mxu0 %v109
    %203 = vmatpush.msra.mxu0 %v108
    %204 = vmatpush.msra.mxu0 %v107
    %205 = vmatpush.msra.mxu0 %v106
    %206 = vmatpush.msra.mxu0 %v105
    %207 = vmatpush.msra.mxu0 %v104
    %208 = vmatpush.msra.mxu0 %v103
    %209 = vmatpush.msra.mxu0 %v102
    %210 = vmatpush.msra.mxu0 %v101
    %211 = vmatpush.msra.mxu0 %v100
    %212 = vmatpush.msra.mxu0 %v99
    %213 = vmatpush.msra.mxu0 %v98
    %214 = vmatpush.msra.mxu0 %v97
    %215 = vmatpush.msra.mxu0 %v96
    %216 = vmatpush.msra.mxu0 %v95
    %217 = vmatmul.f32.gmra.mxu0 %v88
    %v218 = vpop.f32.mrf.mxu0
    %v219 = vadd.f32 %v195, %v218
    %220 = vdwg.mxu0
    %221 = vmatpush.msra.mxu0 %v126
    %222 = vmatpush.msra.mxu0 %v125
    %223 = vmatpush.msra.mxu0 %v124
    %224 = vmatpush.msra.mxu0 %v123
    %225 = vmatpush.msra.mxu0 %v122
    %226 = vmatpush.msra.mxu0 %v121
    %227 = vmatpush.msra.mxu0 %v120
    %228 = vmatpush.msra.mxu0 %v119
    %229 = vmatpush.msra.mxu0 %v118
    %230 = vmatpush.msra.mxu0 %v117
    %231 = vmatpush.msra.mxu0 %v116
    %232 = vmatpush.msra.mxu0 %v115
    %233 = vmatpush.msra.mxu0 %v114
    %234 = vmatpush.msra.mxu0 %v113
    %235 = vmatpush.msra.mxu0 %v112
    %236 = vmatpush.msra.mxu0 %v111
    %237 = vmatmul.f32.gmra.mxu0 %v89
    %v238 = vpop.f32.mrf.mxu0
    %v239 = vadd.f32 %v219, %v238
    %240 = vdwg.mxu0
    %241 = vmatpush.msra.mxu0 %v142
    %242 = vmatpush.msra.mxu0 %v141
    %243 = vmatpush.msra.mxu0 %v140
    %244 = vmatpush.msra.mxu0 %v139
    %245 = vmatpush.msra.mxu0 %v138
    %246 = vmatpush.msra.mxu0 %v137
    %247 = vmatpush.msra.mxu0 %v136
    %248 = vmatpush.msra.mxu0 %v135
    %249 = vmatpush.msra.mxu0 %v134
    %250 = vmatpush.msra.mxu0 %v133
    %251 = vmatpush.msra.mxu0 %v132
    %252 = vmatpush.msra.mxu0 %v131
    %253 = vmatpush.msra.mxu0 %v130
    %254 = vmatpush.msra.mxu0 %v129
    %255 = vmatpush.msra.mxu0 %v128
    %256 = vmatpush.msra.mxu0 %v127
    %257 = vmatmul.f32.gmra.mxu0 %v90
    %v258 = vpop.f32.mrf.mxu0
    %v259 = vadd.f32 %v239, %v258
    %260 = vdwg.mxu0
    %261 = vmatpush.msra.mxu0 %v158
    %262 = vmatpush.msra.mxu0 %v157
    %263 = vmatpush.msra.mxu0 %v156
    %264 = vmatpush.msra.mxu0 %v155
    %265 = vmatpush.msra.mxu0 %v154
    %266 = vmatpush.msra.mxu0 %v153
    %267 = vmatpush.msra.mxu0 %v152
    %268 = vmatpush.msra.mxu0 %v151
    %269 = vmatpush.msra.mxu0 %v150
    %270 = vmatpush.msra.mxu0 %v149
    %271 = vmatpush.msra.mxu0 %v148
    %272 = vmatpush.msra.mxu0 %v147
    %273 = vmatpush.msra.mxu0 %v146
    %274 = vmatpush.msra.mxu0 %v145
    %275 = vmatpush.msra.mxu0 %v144
    %276 = vmatpush.msra.mxu0 %v143
    %277 = vmatmul.f32.gmra.mxu0 %v91
    %v278 = vpop.f32.mrf.mxu0
    %v279 = vadd.f32 %v259, %v278
    %280 = vdwg.mxu0
    %281 = vmatpush.msra.mxu0 %v174
    %282 = vmatpush.msra.mxu0 %v173
    %283 = vmatpush.msra.mxu0 %v172
    %284 = vmatpush.msra.mxu0 %v171
    %285 = vmatpush.msra.mxu0 %v170
    %286 = vmatpush.msra.mxu0 %v169
    %287 = vmatpush.msra.mxu0 %v168
    %288 = vmatpush.msra.mxu0 %v167
    %289 = vmatpush.msra.mxu0 %v166
    %290 = vmatpush.msra.mxu0 %v165
    %291 = vmatpush.msra.mxu0 %v164
    %292 = vmatpush.msra.mxu0 %v163
    %293 = vmatpush.msra.mxu0 %v162
    %294 = vmatpush.msra.mxu0 %v161
    %295 = vmatpush.msra.mxu0 %v160
    %296 = vmatpush.msra.mxu0 %v159
    %297 = vmatmul.f32.gmra.mxu0 %v92
    %v298 = vpop.f32.mrf.mxu0
    %v299 = vadd.f32 %v279, %v298
    %300 = vdwg.mxu0
    %301 = vmatpush.msra.mxu0 %v190
    %302 = vmatpush.msra.mxu0 %v189
    %303 = vmatpush.msra.mxu0 %v188
    %304 = vmatpush.msra.mxu0 %v187
    %305 = vmatpush.msra.mxu0 %v186
    %306 = vmatpush.msra.mxu0 %v185
    %307 = vmatpush.msra.mxu0 %v184
    %308 = vmatpush.msra.mxu0 %v183
    %309 = vmatpush.msra.mxu0 %v182
    %310 = vmatpush.msra.mxu0 %v181
    %311 = vmatpush.msra.mxu0 %v180
    %312 = vmatpush.msra.mxu0 %v179
    %313 = vmatpush.msra.mxu0 %v178
    %314 = vmatpush.msra.mxu0 %v177
    %315 = vmatpush.msra.mxu0 %v176
    %316 = vmatpush.msra.mxu0 %v175
    %317 = vmatmul.f32.gmra.mxu0 %v93
    %v318 = vpop.f32.mrf.mxu0
    %v319 = vadd.f32 %v299, %v318
    %320 = vdwg.mxu0
    %321 = vmatpush.msra.mxu0 0.0
    %322 = vmatpush.msra.mxu0 0.0
    %323 = vmatpush.msra.mxu0 0.0
    %324 = vmatpush.msra.mxu0 0.0
    %325 = vmatpush.msra.mxu0 0.0
    %326 = vmatpush.msra.mxu0 0.0
    %327 = vmatpush.msra.mxu0 0.0
    %328 = vmatpush.msra.mxu0 0.0
    %329 = vmatpush.msra.mxu0 0.0
    %330 = vmatpush.msra.mxu0 0.0
    %331 = vmatpush.msra.mxu0 0.0
    %332 = vmatpush.msra.mxu0 0.0
    %333 = vmatpush.msra.mxu0 0.0
    %334 = vmatpush.msra.mxu0 0.0
    %335 = vmatpush.msra.mxu0 %v192
    %336 = vmatpush.msra.mxu0 %v191
    %337 = vmatmul.f32.gmra.mxu0 %v199
    %v338 = vpop.f32.mrf.mxu0
    %v339 = vadd.f32 %v319, %v338
    %340 = vdwg.mxu0
    %v341 = vmax.f32 %v339, 0.0
    %v342 = vld [vmem:[#allocation7] sm:$0xff]
    %v343 = vld [vmem:[#allocation7 + $0x8] sm:$0xff]
    %v344 = vld [vmem:[#allocation7 + $0x10] sm:$0xff]
    %v345 = vld [vmem:[#allocation7 + $0x18] sm:$0xff]
    %v346 = vld [vmem:[#allocation7 + $0x20] sm:$0xff]
    %v347 = vld [vmem:[#allocation7 + $0x28] sm:$0xff]
    %v348 = vld [vmem:[#allocation7 + $0x30] sm:$0xff]
    %v349 = vld [vmem:[#allocation7 + $0x38] sm:$0xff]
    %v350 = vld [vmem:[#allocation7 + $0x40] sm:$0xff]
    %v351 = vld [vmem:[#allocation7 + $0x48] sm:$0xff]
    %v352 = vld [vmem:[#allocation7 + $0x50] sm:$0xff]
    %v353 = vld [vmem:[#allocation7 + $0x58] sm:$0xff]
    %v354 = vld [vmem:[#allocation7 + $0x60] sm:$0xff]
    %v355 = vld [vmem:[#allocation7 + $0x68] sm:$0xff]
    %v356 = vld [vmem:[#allocation7 + $0x70] sm:$0xff]
    %v357 = vld [vmem:[#allocation7 + $0x78] sm:$0xff]
    %v358 = vld [vmem:[%s4] sm:$0x1]
    %v360 = vperm.slane %v358, 0
    %362 = vmatpush.msra.mxu0 %v357
    %363 = vmatpush.msra.mxu0 %v356
    %364 = vmatpush.msra.mxu0 %v355
    %365 = vmatpush.msra.mxu0 %v354
    %366 = vmatpush.msra.mxu0 %v353
    %367 = vmatpush.msra.mxu0 %v352
    %368 = vmatpush.msra.mxu0 %v351
    %369 = vmatpush.msra.mxu0 %v350
    %370 = vmatpush.msra.mxu0 %v349
    %371 = vmatpush.msra.mxu0 %v348
    %372 = vmatpush.msra.mxu0 %v347
    %373 = vmatpush.msra.mxu0 %v346
    %374 = vmatpush.msra.mxu0 %v345
    %375 = vmatpush.msra.mxu0 %v344
    %376 = vmatpush.msra.mxu0 %v343
    %377 = vmatpush.msra.mxu0 %v342
    %378 = vmatmul.f32.gmra.mxu0 %v341
    %v379 = vpop.f32.mrf.mxu0
    %v380 = vadd.f32 %v360, %v379
    %381 = vdwg.mxu0
    %v382 = vmax.f32 %v380, 0.0
    %v383 = vld [vmem:[#allocation8] sm:$0xff]
    %v384 = vld [vmem:[#allocation8 + $0x8] sm:$0xff]
    %v385 = vld [vmem:[#allocation8 + $0x10] sm:$0xff]
    %v386 = vld [vmem:[#allocation8 + $0x18] sm:$0xff]
    %v387 = vld [vmem:[#allocation8 + $0x20] sm:$0xff]
    %v388 = vld [vmem:[#allocation8 + $0x28] sm:$0xff]
    %v389 = vld [vmem:[#allocation8 + $0x30] sm:$0xff]
    %v390 = vld [vmem:[#allocation8 + $0x38] sm:$0xff]
    %v391 = vld [vmem:[#allocation8 + $0x40] sm:$0xff]
    %v392 = vld [vmem:[#allocation8 + $0x48] sm:$0xff]
    %v393 = vld [vmem:[#allocation8 + $0x50] sm:$0xff]
    %v394 = vld [vmem:[#allocation8 + $0x58] sm:$0xff]
    %v395 = vld [vmem:[#allocation8 + $0x60] sm:$0xff]
    %v396 = vld [vmem:[#allocation8 + $0x68] sm:$0xff]
    %v397 = vld [vmem:[#allocation8 + $0x70] sm:$0xff]
    %v398 = vld [vmem:[#allocation8 + $0x78] sm:$0xff]
    %v399 = vld [vmem:[%s6] sm:$0x1]
    %v401 = vperm.slane %v399, 0
    %403 = vmatpush.msra.mxu0 %v398
    %404 = vmatpush.msra.mxu0 %v397
    %405 = vmatpush.msra.mxu0 %v396
    %406 = vmatpush.msra.mxu0 %v395
    %407 = vmatpush.msra.mxu0 %v394
    %408 = vmatpush.msra.mxu0 %v393
    %409 = vmatpush.msra.mxu0 %v392
    %410 = vmatpush.msra.mxu0 %v391
    %411 = vmatpush.msra.mxu0 %v390
    %412 = vmatpush.msra.mxu0 %v389
    %413 = vmatpush.msra.mxu0 %v388
    %414 = vmatpush.msra.mxu0 %v387
    %415 = vmatpush.msra.mxu0 %v386
    %416 = vmatpush.msra.mxu0 %v385
    %417 = vmatpush.msra.mxu0 %v384
    %418 = vmatpush.msra.mxu0 %v383
    %419 = vmatmul.f32.gmra.mxu0 %v382
    %v420 = vpop.f32.mrf.mxu0
    %v421 = vadd.f32 %v401, %v420
    %422 = vdwg.mxu0
    %423 = vst [vmem:[#allocation10] sm:$0xff] %v421
    // Predicated region
    $region46: #{tpu_custom_call.1} parent=1 // pred_check
      _
    $region47: #{tpu_custom_call.1} parent=1 // pred_check_branch
      %425 = sbr.rel (0) target = $region49
    $region48: #{tpu_custom_call.1} parent=1 // pred_region
      %427 = vsyncadd [#allocation4], 0
      %s429 = sshll.u32 [#allocation10], 4
      %s430 = int_to_ptr.vmem [resolvable:$true] %s429
      %s431 = sshll.u32 %s7, 4
      %s432 = int_to_ptr.hbm [resolvable:$true] %s431
      %434 = dma.vmem_to_hbm [thread:$0]  %s430, 128, %s432, [#allocation4]
    $region49: #{tpu_custom_call.1} parent=1 // pred_fallthru
      _
    // Predicated region
    $region50: #{tpu_custom_call.1} parent=1 // pred_check
      _
    $region51: #{tpu_custom_call.1} parent=1 // pred_check_branch
      %436 = sbr.rel (0) target = $region53
    $region52: #{tpu_custom_call.1} parent=1 // pred_region
      %438 = dma.done [#allocation4], 128
    $region53: #{tpu_custom_call.1} parent=1 // pred_fallthru
      _
    %439 = vsyncpa [#allocation3], 1
    %440 = vsyncpa [#allocation6], 1
    %441 = vsyncpa [#allocation9], 1
    %442 = vsyncpa [#allocation4], 1

</llo_original>
